<compile_context>
chip_gen: v7x
topology: tpu7x:2x2x1
jax: 0.10.0
libtpu: 0.0.40
codegen_flags: <defaults>
</compile_context>

<pallas_src>
import math
import functools

import jax
import jax.numpy as jnp
from jax.experimental import pallas as pl
from jax.experimental.pallas import tpu as pltpu

_AMIN = 1e-10
_AMIN_SQ = _AMIN * _AMIN
_DB_SCALE = 20.0 / math.log(10.0)   # 20*log10(x) == _DB_SCALE * ln(x)


def _vmem_capacity_bytes() -> int:
    try:
        return int(pltpu.get_tpu_info().vmem_capacity_bytes)
    except Exception:
        return 64 * 2**20            # conservative (v7x-sized) fallback


def _lane_flop_cap() -> int:
    # The pair-sum / expand matmuls cost O(TL) f32 MACs per complex sample; cap the lane
    # tile so they stay comfortably under the HBM roofline on the weak-MXU generation.
    try:
        kind = jax.devices()[0].device_kind.lower()
    except Exception:
        kind = ""
    return 256 if "v5" in kind else 512


def _choose_lane_tile(L: int, F: int, vmem_capacity: int, lane_cap: int) -> int:
    # v7x (64 MiB VMEM): ~37.5% tile budget; 128 MiB parts (v5e/v6e): ~50%.
    if vmem_capacity < 96 * 2**20:
        budget = (vmem_capacity * 3) // 8
    else:
        budget = vmem_capacity // 2
    # ~16 live f32 (F, lane) planes: double-buffered x/x2/mask blocks + in-kernel temporaries.
    max_tl_vmem = budget // (64 * max(F, 1))
    cap = max(256, min(lane_cap, (max_tl_vmem // 256) * 256))
    return L if L <= cap else cap     # tiled TL is a multiple of 256 -> TL/2 lane-aligned


def _impaug1_kernel(x_ref, wg_ref, bg_ref, p_ref, pt_ref,
                    mask_ref, x2_ref, psum_ref, *, has_tail, total_t):
    x = x_ref[0]                                   # (F, TL): lanes interleave (re, im)
    sq = x * x

    # Pair-sum + de-interleave on the MXU (exact 0/1 weights): magsq[f,t] = re^2 + im^2.
    magsq = jnp.dot(sq, p_ref[...], preferred_element_type=jnp.float32)        # (F, TLh)

    # AmplitudeToDB('magnitude'): 20*log10(max(|x|,1e-10)) == 0.5*k*ln(max(|x|^2, 1e-20))
    xdb = (0.5 * _DB_SCALE) * jnp.log(jnp.maximum(magsq, _AMIN_SQ))

    # Generator: per-time-frame linear over frequency + sigmoid (half lane width).
    z = jnp.dot(wg_ref[...], xdb, preferred_element_type=jnp.float32) + bg_ref[...]
    mask = jax.nn.sigmoid(z)                                                    # (F, TLh)
    mask_ref[0] = mask                              # de-duplicated (B, F, T) output

    # Default mask_option branch: x2 = x * (1 + mask); expand mask back to interleaved
    # lanes with the transpose 0/1 matrix (MXU slot has slack; kernel is HBM-bound).
    mask_dup = jnp.dot(mask, pt_ref[...], preferred_element_type=jnp.float32)   # (F, TL)
    x2_ref[0] = x * (1.0 + mask_dup)

    # Classifier features: AmplitudeToDB(|x2|) = xdB + 20*log10(1 + mask); emit the
    # per-tile time partial sum (head finished in the wrapper).
    db2 = xdb + _DB_SCALE * jnp.log(1.0 + mask)
    if has_tail:                                    # static: only when L % TL != 0
        col = jax.lax.broadcasted_iota(jnp.int32, db2.shape, 1)
        valid = (col + pl.program_id(1) * db2.shape[1]) < total_t
        db2 = jnp.where(valid, db2, 0.0)
    psum_ref[0, 0] = jnp.sum(db2, axis=1, keepdims=True)                        # (F, 1)


def impaug1_forward(x, wg, bg, wc, bc):
    """x: [B, 1, F, T, 2] f32 (real/imag pairs). Returns (out, mask, x1, x2)."""
    B, C, F, T, two = x.shape
    assert C == 1 and two == 2
    K = wc.shape[1]
    L = 2 * T                                       # interleaved lane extent
    x_il = x.reshape(B, F, L)                       # free reshape of contiguous [B,1,F,T,2]

    cap_bytes = _vmem_capacity_bytes()
    TL = _choose_lane_tile(L, F, cap_bytes, _lane_flop_cap())
    TLh = TL // 2
    n_t = pl.cdiv(L, TL)
    has_tail = (L % TL) != 0

    # 0/1 pair-sum (P) and duplicate-expand (P^T) matrices; constant index_map -> DMA'd once.
    pair = (jnp.arange(TL, dtype=jnp.int32)[:, None] // 2
            == jnp.arange(TLh, dtype=jnp.int32)[None, :]).astype(jnp.float32)   # (TL, TLh)
    pair_t = pair.T                                                              # (TLh, TL)

    kernel = functools.partial(_impaug1_kernel, has_tail=has_tail, total_t=T)

    out_shapes = (
        jax.ShapeDtypeStruct((B, F, T), jnp.float32),        # mask (de-duplicated)
        jax.ShapeDtypeStruct((B, F, L), jnp.float32),        # x2 (interleaved re/im)
        jax.ShapeDtypeStruct((B, n_t, F, 1), jnp.float32),   # per-tile classifier partials
    )

    grid_spec = pltpu.PrefetchScalarGridSpec(
        num_scalar_prefetch=0,
        grid=(B, n_t),
        in_specs=[
            pl.BlockSpec((1, F, TL), lambda b, t: (b, 0, t)),      # x (interleaved)
            pl.BlockSpec((F, F), lambda b, t: (0, 0)),             # generator weight
            pl.BlockSpec((F, 1), lambda b, t: (0, 0)),             # generator bias
            pl.BlockSpec((TL, TLh), lambda b, t: (0, 0)),          # pair-sum matrix P
            pl.BlockSpec((TLh, TL), lambda b, t: (0, 0)),          # expand matrix P^T
        ],
        out_specs=[
            pl.BlockSpec((1, F, TLh), lambda b, t: (b, 0, t)),
            pl.BlockSpec((1, F, TL), lambda b, t: (b, 0, t)),
            pl.BlockSpec((1, 1, F, 1), lambda b, t: (b, t, 0, 0)),
        ],
    )

    cost = pl.CostEstimate(
        flops=B * n_t * (4 * F * TL * TLh + 2 * F * F * TLh),
        transcendentals=3 * B * F * T,
        bytes_accessed=4 * (2 * B * F * L + B * F * T + B * n_t * F
                            + F * F + 2 * F + 2 * TL * TLh),
    )

    need = 4 * (12 * F * TL + 4 * TL * TLh + 2 * F * F + 8 * F + 4096)
    vmem_limit = int(min(0.75 * cap_bytes, max(0.5 * cap_bytes, 1.5 * need)))

    mask_bft, x2_il, psum = pl.pallas_call(
        kernel,
        out_shape=out_shapes,
        grid_spec=grid_spec,
        compiler_params=pltpu.CompilerParams(
            dimension_semantics=("parallel", "parallel"),
            vmem_limit_bytes=vmem_limit,
        ),
        cost_estimate=cost,
    )(x_il, wg, bg, pair, pair_t)

    # Tiny classifier head (time-mean of dB(|x2|) -> linear) outside the HBM-bound kernel,
    # so both grid axes stay "parallel" (megacore coverage even for B == 1).
    feats = jnp.sum(psum[..., 0], axis=1) * (1.0 / float(T))        # (B, F)
    out = jnp.dot(feats, wc, precision='highest') + bc[0]           # (B, K)

    mask = mask_bft.reshape(B, 1, F, T)       # free reshape; no de-dup pass
    x1 = x
    x2 = x2_il.reshape(B, 1, F, T, 2)         # free reshape back to (re, im) pair layout
    return out, mask, x1, x2


def impaug1_reference(x, wg, bg, wc, bc):
    """Pure-JAX reference of the same forward pass (faithful sqrt/clamp formulation)."""
    xr = x[:, 0, :, :, 0]
    xi = x[:, 0, :, :, 1]
    mag = jnp.sqrt(xr * xr + xi * xi)
    xdb = _DB_SCALE * jnp.log(jnp.maximum(mag, _AMIN))
    z = jnp.einsum('fg,bgt->bft', wg, xdb, precision='highest') + bg[None]
    mask = jax.nn.sigmoid(z)
    s = 1.0 + mask
    x2r, x2i = xr * s, xi * s
    mag2 = jnp.sqrt(x2r * x2r + x2i * x2i)
    db2 = _DB_SCALE * jnp.log(jnp.maximum(mag2, _AMIN))
    feats = jnp.mean(db2, axis=-1)                    # [B, F]
    out = jnp.dot(feats, wc, precision='highest') + bc[0]
    x2 = jnp.stack([x2r, x2i], axis=-1)[:, None]
    return out, mask[:, None], x, x2


if __name__ == "__main__":
    B, C, F, T, K = 2, 1, 16, 64, 8
    key = jax.random.PRNGKey(0)
    k1, k2, k3, k4, k5 = jax.random.split(key, 5)

    x = jax.random.normal(k1, (B, C, F, T, 2), jnp.float32)
    wg = 0.1 * jax.random.normal(k2, (F, F), jnp.float32)
    bg = 0.1 * jax.random.normal(k3, (F, 1), jnp.float32)
    wc = 0.1 * jax.random.normal(k4, (F, K), jnp.float32)
    bc = 0.1 * jax.random.normal(k5, (1, K), jnp.float32)

    fwd = jax.jit(impaug1_forward)
    out, mask, x1, x2 = fwd(x, wg, bg, wc, bc)
    jax.block_until_ready((out, mask, x1, x2))

    out_r, mask_r, x1_r, x2_r = impaug1_reference(x, wg, bg, wc, bc)
    assert jnp.allclose(out, out_r, rtol=1e-2, atol=1e-2)
    assert jnp.allclose(mask, mask_r, rtol=1e-2, atol=1e-2)
    assert jnp.allclose(x1, x1_r)
    assert jnp.allclose(x2, x2_r, rtol=1e-2, atol=1e-2)

    print("KERNEL_OK")
</pallas_src>

<mosaic_0001>
module attributes {stable_mosaic.version = 11 : i64} {
  func.func @_impaug1_kernel(%arg0: i32, %arg1: i32, %arg2: memref<1x16x128xf32, #tpu.memory_space<vmem>>, %arg3: memref<16x16xf32, #tpu.memory_space<vmem>>, %arg4: memref<16x1xf32, #tpu.memory_space<vmem>>, %arg5: memref<128x64xf32, #tpu.memory_space<vmem>>, %arg6: memref<64x128xf32, #tpu.memory_space<vmem>>, %arg7: memref<1x16x64xf32, #tpu.memory_space<vmem>>, %arg8: memref<1x16x128xf32, #tpu.memory_space<vmem>>, %arg9: memref<1x1x16x1xf32, #tpu.memory_space<vmem>>) attributes {dimension_semantics = [#tpu.dimension_semantics<parallel>, #tpu.dimension_semantics<parallel>], iteration_bounds = array<i64: 2, 1>, scalar_prefetch = 0 : i64, scratch_operands = 0 : i64, tpu.core_type = #tpu.core_type<tc>, window_params = [{transform_indices = @transform_0, window_bounds = array<i64: 1, 16, 128>}, {pipeline_mode = #tpu.pipeline_mode<synchronous>, transform_indices = @transform_1, window_bounds = array<i64: 16, 16>}, {pipeline_mode = #tpu.pipeline_mode<synchronous>, transform_indices = @transform_2, window_bounds = array<i64: 16, 1>}, {pipeline_mode = #tpu.pipeline_mode<synchronous>, transform_indices = @transform_3, window_bounds = array<i64: 128, 64>}, {pipeline_mode = #tpu.pipeline_mode<synchronous>, transform_indices = @transform_4, window_bounds = array<i64: 64, 128>}, {transform_indices = @transform_5, window_bounds = array<i64: 1, 16, 64>}, {transform_indices = @transform_6, window_bounds = array<i64: 1, 16, 128>}, {transform_indices = @transform_7, window_bounds = array<i64: 1, 1, 16, 1>}]} {
    %c0 = arith.constant 0 : index
    %c0_0 = arith.constant 0 : index
    %c0_1 = arith.constant 0 : index
    %0 = vector.load %arg2[%c0, %c0_0, %c0_1] : memref<1x16x128xf32, #tpu.memory_space<vmem>>, vector<1x16x128xf32>
    %1 = vector.shape_cast %0 : vector<1x16x128xf32> to vector<16x128xf32>
    %2 = arith.mulf %1, %1 : vector<16x128xf32>
    %c0_2 = arith.constant 0 : index
    %c0_3 = arith.constant 0 : index
    %3 = vector.load %arg5[%c0_2, %c0_3] : memref<128x64xf32, #tpu.memory_space<vmem>>, vector<128x64xf32>
    %cst = arith.constant dense<0.000000e+00> : vector<16x64xf32>
    %4 = tpu.matmul %2, %3, %cst {dimension_numbers = #tpu.dot_dimension_numbers<[1], [0], [0], [1], [0, 0, 1, 1], [], []>} : vector<16x128xf32>, vector<128x64xf32>, vector<16x64xf32> -> vector<16x64xf32>
    %cst_4 = arith.constant 9.99999968E-21 : f32
    %5 = vector.broadcast %cst_4 : f32 to vector<16x64xf32>
    %6 = arith.maximumf %4, %5 : vector<16x64xf32>
    %7 = math.log %6 : vector<16x64xf32>
    %cst_5 = arith.constant 4.34294462 : f32
    %8 = vector.broadcast %cst_5 : f32 to vector<16x64xf32>
    %9 = arith.mulf %8, %7 : vector<16x64xf32>
    %c0_6 = arith.constant 0 : index
    %c0_7 = arith.constant 0 : index
    %10 = vector.load %arg3[%c0_6, %c0_7] : memref<16x16xf32, #tpu.memory_space<vmem>>, vector<16x16xf32>
    %cst_8 = arith.constant dense<0.000000e+00> : vector<16x64xf32>
    %11 = tpu.matmul %10, %9, %cst_8 {dimension_numbers = #tpu.dot_dimension_numbers<[1], [0], [0], [1], [0, 0, 1, 1], [], []>} : vector<16x16xf32>, vector<16x64xf32>, vector<16x64xf32> -> vector<16x64xf32>
    %c0_9 = arith.constant 0 : index
    %c0_10 = arith.constant 0 : index
    %12 = vector.load %arg4[%c0_9, %c0_10] : memref<16x1xf32, #tpu.memory_space<vmem>>, vector<16x1xf32>
    %13 = vector.broadcast %12 : vector<16x1xf32> to vector<16x64xf32>
    %14 = arith.addf %11, %13 : vector<16x64xf32>
    %15 = arith.negf %14 : vector<16x64xf32>
    %16 = math.exp %15 : vector<16x64xf32>
    %cst_11 = arith.constant 1.000000e+00 : f32
    %17 = vector.broadcast %cst_11 : f32 to vector<16x64xf32>
    %18 = arith.addf %17, %16 : vector<16x64xf32>
    %19 = arith.divf %17, %18 : vector<16x64xf32>
    %c0_12 = arith.constant 0 : index
    %c0_13 = arith.constant 0 : index
    %c0_14 = arith.constant 0 : index
    %20 = vector.load %arg7[%c0_12, %c0_13, %c0_14] : memref<1x16x64xf32, #tpu.memory_space<vmem>>, vector<1x16x64xf32>
    %21 = vector.shape_cast %20 : vector<1x16x64xf32> to vector<16x64xf32>
    %22 = vector.shape_cast %19 : vector<16x64xf32> to vector<1x16x64xf32>
    tpu.vector_store %arg7[%c0_12, %c0_13, %c0_14], %22 {strides = array<i32>} : memref<1x16x64xf32, #tpu.memory_space<vmem>>, vector<1x16x64xf32>,
    %c0_15 = arith.constant 0 : index
    %c0_16 = arith.constant 0 : index
    %23 = vector.load %arg6[%c0_15, %c0_16] : memref<64x128xf32, #tpu.memory_space<vmem>>, vector<64x128xf32>
    %cst_17 = arith.constant dense<0.000000e+00> : vector<16x128xf32>
    %24 = tpu.matmul %19, %23, %cst_17 {dimension_numbers = #tpu.dot_dimension_numbers<[1], [0], [0], [1], [0, 0, 1, 1], [], []>} : vector<16x64xf32>, vector<64x128xf32>, vector<16x128xf32> -> vector<16x128xf32>
    %cst_18 = arith.constant 1.000000e+00 : f32
    %25 = vector.broadcast %cst_18 : f32 to vector<16x128xf32>
    %26 = arith.addf %25, %24 : vector<16x128xf32>
    %27 = arith.mulf %1, %26 : vector<16x128xf32>
    %c0_19 = arith.constant 0 : index
    %c0_20 = arith.constant 0 : index
    %c0_21 = arith.constant 0 : index
    %28 = vector.load %arg8[%c0_19, %c0_20, %c0_21] : memref<1x16x128xf32, #tpu.memory_space<vmem>>, vector<1x16x128xf32>
    %29 = vector.shape_cast %28 : vector<1x16x128xf32> to vector<16x128xf32>
    %30 = vector.shape_cast %27 : vector<16x128xf32> to vector<1x16x128xf32>
    tpu.vector_store %arg8[%c0_19, %c0_20, %c0_21], %30 {strides = array<i32>} : memref<1x16x128xf32, #tpu.memory_space<vmem>>, vector<1x16x128xf32>,
    %cst_22 = arith.constant 1.000000e+00 : f32
    %31 = vector.broadcast %cst_22 : f32 to vector<16x64xf32>
    %32 = arith.addf %31, %19 : vector<16x64xf32>
    %33 = math.log %32 : vector<16x64xf32>
    %cst_23 = arith.constant 8.68588924 : f32
    %34 = vector.broadcast %cst_23 : f32 to vector<16x64xf32>
    %35 = arith.mulf %34, %33 : vector<16x64xf32>
    %36 = arith.addf %9, %35 : vector<16x64xf32>
    %cst_24 = arith.constant dense<0.000000e+00> : vector<16xf32>
    %37 = vector.multi_reduction <add>, %36, %cst_24 [1] : vector<16x64xf32> to vector<16xf32>
    %38 = vector.shape_cast %37 : vector<16xf32> to vector<16x1xf32>
    %c0_25 = arith.constant 0 : index
    %c0_26 = arith.constant 0 : index
    %c0_27 = arith.constant 0 : index
    %c0_28 = arith.constant 0 : index
    %39 = vector.load %arg9[%c0_25, %c0_26, %c0_27, %c0_28] : memref<1x1x16x1xf32, #tpu.memory_space<vmem>>, vector<1x1x16x1xf32>
    %40 = vector.shape_cast %39 : vector<1x1x16x1xf32> to vector<16x1xf32>
    %41 = vector.shape_cast %38 : vector<16x1xf32> to vector<1x1x16x1xf32>
    tpu.vector_store %arg9[%c0_25, %c0_26, %c0_27, %c0_28], %41 {strides = array<i32>} : memref<1x1x16x1xf32, #tpu.memory_space<vmem>>, vector<1x1x16x1xf32>,
    return
  }
  func.func @transform_0(%arg0: i32, %arg1: i32) -> (i32, i32, i32) {
    %c0_i32 = arith.constant 0 : i32
    %c0_i32_0 = arith.constant 0 : i32
    return %arg0, %c0_i32, %arg1 : i32, i32, i32
  }
  func.func @transform_1(%arg0: i32, %arg1: i32) -> (i32, i32) {
    %c0_i32 = arith.constant 0 : i32
    %c0_i32_0 = arith.constant 0 : i32
    %c0_i32_1 = arith.constant 0 : i32
    return %c0_i32, %c0_i32_0 : i32, i32
  }
  func.func @transform_2(%arg0: i32, %arg1: i32) -> (i32, i32) {
    %c0_i32 = arith.constant 0 : i32
    %c0_i32_0 = arith.constant 0 : i32
    %c0_i32_1 = arith.constant 0 : i32
    return %c0_i32, %c0_i32_0 : i32, i32
  }
  func.func @transform_3(%arg0: i32, %arg1: i32) -> (i32, i32) {
    %c0_i32 = arith.constant 0 : i32
    %c0_i32_0 = arith.constant 0 : i32
    %c0_i32_1 = arith.constant 0 : i32
    return %c0_i32, %c0_i32_0 : i32, i32
  }
  func.func @transform_4(%arg0: i32, %arg1: i32) -> (i32, i32) {
    %c0_i32 = arith.constant 0 : i32
    %c0_i32_0 = arith.constant 0 : i32
    %c0_i32_1 = arith.constant 0 : i32
    return %c0_i32, %c0_i32_0 : i32, i32
  }
  func.func @transform_5(%arg0: i32, %arg1: i32) -> (i32, i32, i32) {
    %c0_i32 = arith.constant 0 : i32
    %c0_i32_0 = arith.constant 0 : i32
    return %arg0, %c0_i32, %arg1 : i32, i32, i32
  }
  func.func @transform_6(%arg0: i32, %arg1: i32) -> (i32, i32, i32) {
    %c0_i32 = arith.constant 0 : i32
    %c0_i32_0 = arith.constant 0 : i32
    return %arg0, %c0_i32, %arg1 : i32, i32, i32
  }
  func.func @transform_7(%arg0: i32, %arg1: i32) -> (i32, i32, i32, i32) {
    %c0_i32 = arith.constant 0 : i32
    %c0_i32_0 = arith.constant 0 : i32
    %c0_i32_1 = arith.constant 0 : i32
    return %arg0, %arg1, %c0_i32, %c0_i32_0 : i32, i32, i32, i32
  }
}

</mosaic_0001>

<llo_original>
// kernel: impaug1_forward.1
$region0: #{impaug1_forward.1}
  #allocation0 [shape = 'u32[]', space=smem, size = 0x4, offset = 0x4, fixed_abs, tag = 'smem constant byte address 0x4 - core index']
  #allocation1 [shape = 'u32[144,128]{1,0:T(1,128)}', space=vmem, size = 0x12000, scoped, tag = 'internal scratch']
  %s0 = inlined_call_operand.vmem [shape: f32[2,16,128], index: 0, kind: input, shape index: {}]
  %s1 = inlined_call_operand.vmem [shape: f32[16,16], index: 1, kind: input, shape index: {}]
  %s2 = inlined_call_operand.vmem [shape: f32[16,1], index: 2, kind: input, shape index: {}]
  %s3 = inlined_call_operand.vmem [shape: f32[128,64], index: 3, kind: input, shape index: {}]
  %s4 = inlined_call_operand.vmem [shape: f32[64,128], index: 4, kind: input, shape index: {}]
  %s5 = inlined_call_operand.hbm [shape: f32[2,16,64], index: 5, kind: output, shape index: {0}]
  %s6 = inlined_call_operand.vmem [shape: f32[2,16,128], index: 6, kind: output, shape index: {1}]
  %s7 = inlined_call_operand.vmem [shape: f32[2,1,16,1], index: 7, kind: output, shape index: {2}]
  %8 = xla_tuple %s5, %s6, %s7
  %s9 = sld [smem:[#allocation0]]
  $region69: #{impaug1_forward.1} parent=0
    _
  %s11 = ssub.s32 1, %s9
  %s12 = scalar_select 0, %s11, %s9
  $region1: #{impaug1_forward.1} parent=0
    #allocation2 [shape = 'u8[16384]{0}', space=vmem, size = 0x4000, scoped, tag = 'output window, operand 0']
    #allocation3 [shape = 's32[2]{0}', space=sflag, size = 0x8, scoped, tag = 'scoped memory for impaug1_forward.1']
    %13 = vsyncpa [#allocation3], 0
    %s14 = scalar_lea.sflag [#allocation3], 1
    %15 = vsyncpa %s14, 0
    loop: start=0, step=1, limit=4
    $region2: #{impaug1_forward.1} parent=1 // loop_pre_header
      _
    $region3: #{impaug1_forward.1} parent=1 // loop_header
      %s17 = sphi 0, %s21
      %p18 = scmp.ge.s32.totalorder %s17, 4
      %s24 = sphi 0, %s36
      %s25 = sphi 0, %s32
      %s26 = sphi 0, %s24
      %s27 = sphi 0, %s25
      %s28 = sphi 0, %s26
      %s29 = sphi 0, %s27
      %s41 = sphi 0, %s43
      %s44 = sphi 0, %s41
      %s45 = sphi 0, %s44
      %s61 = sphi 0, %s45
      %s65 = sphi 0, %s65
      %s67 = sphi 0, %s65
      %s68 = sphi 0, %s67
      %s82 = sphi 0, %s68
      %s86 = sphi 0, %s86
      %s88 = sphi 0, %s86
      %s89 = sphi 0, %s88
      %s103 = sphi 0, %s89
      %s107 = sphi 0, %s107
      %s109 = sphi 0, %s107
      %s110 = sphi 0, %s109
      %s124 = sphi 0, %s110
      %s128 = sphi 0, %s128
      %s130 = sphi 0, %s128
      %s131 = sphi 0, %s130
      %s145 = sphi 0, %s131
      %s153 = sphi 0, %s155
      %s156 = sphi 0, %s153
      %s157 = sphi 0, %s156
      %s173 = sphi 0, %s157
      %s181 = sphi 0, %s183
      %s184 = sphi 0, %s181
      %s185 = sphi 0, %s184
      %s201 = sphi 0, %s185
      %s209 = sphi 0, %s211
      %s212 = sphi 0, %s209
      %s213 = sphi 0, %s212
      %s229 = sphi 0, %s213
    $region4: #{impaug1_forward.1} parent=1 // loop_header_branch
      %20 = sbr.rel (%p18) target = $region8
    $region5: #{impaug1_forward.1} parent=1 // loop_body
      %s22 = ssub.s32 %s17, 1
      %s23 = ssub.s32 %s17, 2
      %s30 = sadd.s32 1, %s25
      %p31 = scmp.ge.s32.totalorder %s30, 1
      %s32 = scalar_select %p31, 0, %s30
      %s33 = sadd.s32 1, %s24
      %s34 = scalar_select %p31, %s33, %s24
      %p35 = scmp.ge.s32.totalorder %s34, 2
      %s36 = scalar_select %p35, 0, %s34
      %s37 = ssub.s32 %s24, %s36
      %s38 = ssub.s32 %s25, %s32
      %s39 = sor.u32 %s37, %s38
      %p40 = scmp.eq.s32.totalorder %s39, 0
      %s42 = sadd.s32 %s41, 1
      %s43 = scalar_select %p40, %s41, %s42
      %p46 = pneg %p40
      %p47 = scmp.eq.s32.totalorder %s17, 1
      %p48 = por %p46, %p47
      %p49 = scmp.ne.s32.totalorder %s41, %s44
      %p50 = scmp.eq.s32.totalorder %s17, 0
      %p51 = por %p49, %p50
      %p52 = scmp.ne.s32.totalorder %s41, %s44
      %p53 = scmp.eq.s32.totalorder %s22, 1
      %p54 = por %p52, %p53
      %p55 = scmp.ne.s32.totalorder %s44, %s45
      %p56 = scmp.eq.s32.totalorder %s22, 0
      %p57 = por %p55, %p56
      %p58 = scmp.ne.s32.totalorder %s44, %s45
      %p59 = scmp.eq.s32.totalorder %s23, 1
      %p60 = por %p58, %p59
      %p62 = scmp.ne.s32.totalorder %s45, %s61
      %p63 = scmp.eq.s32.totalorder %s23, 0
      %p64 = por %p62, %p63
      %s66 = sadd.s32 %s65, 1
      %p69 = scmp.eq.s32.totalorder %s17, 1
      %p70 = scmp.ne.s32.totalorder %s65, %s67
      %p71 = scmp.eq.s32.totalorder %s17, 0
      %p72 = por %p70, %p71
      %p73 = scmp.ne.s32.totalorder %s65, %s67
      %p74 = scmp.eq.s32.totalorder %s22, 1
      %p75 = por %p73, %p74
      %p76 = scmp.ne.s32.totalorder %s67, %s68
      %p77 = scmp.eq.s32.totalorder %s22, 0
      %p78 = por %p76, %p77
      %p79 = scmp.ne.s32.totalorder %s67, %s68
      %p80 = scmp.eq.s32.totalorder %s23, 1
      %p81 = por %p79, %p80
      %p83 = scmp.ne.s32.totalorder %s68, %s82
      %p84 = scmp.eq.s32.totalorder %s23, 0
      %p85 = por %p83, %p84
      %s87 = sadd.s32 %s86, 1
      %p90 = scmp.eq.s32.totalorder %s17, 1
      %p91 = scmp.ne.s32.totalorder %s86, %s88
      %p92 = scmp.eq.s32.totalorder %s17, 0
      %p93 = por %p91, %p92
      %p94 = scmp.ne.s32.totalorder %s86, %s88
      %p95 = scmp.eq.s32.totalorder %s22, 1
      %p96 = por %p94, %p95
      %p97 = scmp.ne.s32.totalorder %s88, %s89
      %p98 = scmp.eq.s32.totalorder %s22, 0
      %p99 = por %p97, %p98
      %p100 = scmp.ne.s32.totalorder %s88, %s89
      %p101 = scmp.eq.s32.totalorder %s23, 1
      %p102 = por %p100, %p101
      %p104 = scmp.ne.s32.totalorder %s89, %s103
      %p105 = scmp.eq.s32.totalorder %s23, 0
      %p106 = por %p104, %p105
      %s108 = sadd.s32 %s107, 1
      %p111 = scmp.eq.s32.totalorder %s17, 1
      %p112 = scmp.ne.s32.totalorder %s107, %s109
      %p113 = scmp.eq.s32.totalorder %s17, 0
      %p114 = por %p112, %p113
      %p115 = scmp.ne.s32.totalorder %s107, %s109
      %p116 = scmp.eq.s32.totalorder %s22, 1
      %p117 = por %p115, %p116
      %p118 = scmp.ne.s32.totalorder %s109, %s110
      %p119 = scmp.eq.s32.totalorder %s22, 0
      %p120 = por %p118, %p119
      %p121 = scmp.ne.s32.totalorder %s109, %s110
      %p122 = scmp.eq.s32.totalorder %s23, 1
      %p123 = por %p121, %p122
      %p125 = scmp.ne.s32.totalorder %s110, %s124
      %p126 = scmp.eq.s32.totalorder %s23, 0
      %p127 = por %p125, %p126
      %s129 = sadd.s32 %s128, 1
      %p132 = scmp.eq.s32.totalorder %s17, 1
      %p133 = scmp.ne.s32.totalorder %s128, %s130
      %p134 = scmp.eq.s32.totalorder %s17, 0
      %p135 = por %p133, %p134
      %p136 = scmp.ne.s32.totalorder %s128, %s130
      %p137 = scmp.eq.s32.totalorder %s22, 1
      %p138 = por %p136, %p137
      %p139 = scmp.ne.s32.totalorder %s130, %s131
      %p140 = scmp.eq.s32.totalorder %s22, 0
      %p141 = por %p139, %p140
      %p142 = scmp.ne.s32.totalorder %s130, %s131
      %p143 = scmp.eq.s32.totalorder %s23, 1
      %p144 = por %p142, %p143
      %p146 = scmp.ne.s32.totalorder %s131, %s145
      %p147 = scmp.eq.s32.totalorder %s23, 0
      %p148 = por %p146, %p147
      %s149 = ssub.s32 %s24, %s36
      %s150 = ssub.s32 %s25, %s32
      %s151 = sor.u32 %s149, %s150
      %p152 = scmp.eq.s32.totalorder %s151, 0
      %s154 = sadd.s32 %s153, 1
      %s155 = scalar_select %p152, %s153, %s154
      %p158 = pneg %p152
      %p159 = scmp.eq.s32.totalorder %s17, 1
      %p160 = por %p158, %p159
      %p161 = scmp.ne.s32.totalorder %s153, %s156
      %p162 = scmp.eq.s32.totalorder %s17, 0
      %p163 = por %p161, %p162
      %p164 = scmp.ne.s32.totalorder %s153, %s156
      %p165 = scmp.eq.s32.totalorder %s22, 1
      %p166 = por %p164, %p165
      %p167 = scmp.ne.s32.totalorder %s156, %s157
      %p168 = scmp.eq.s32.totalorder %s22, 0
      %p169 = por %p167, %p168
      %p170 = scmp.ne.s32.totalorder %s156, %s157
      %p171 = scmp.eq.s32.totalorder %s23, 1
      %p172 = por %p170, %p171
      %p174 = scmp.ne.s32.totalorder %s157, %s173
      %p175 = scmp.eq.s32.totalorder %s23, 0
      %p176 = por %p174, %p175
      %s177 = ssub.s32 %s24, %s36
      %s178 = ssub.s32 %s25, %s32
      %s179 = sor.u32 %s177, %s178
      %p180 = scmp.eq.s32.totalorder %s179, 0
      %s182 = sadd.s32 %s181, 1
      %s183 = scalar_select %p180, %s181, %s182
      %p186 = pneg %p180
      %p187 = scmp.eq.s32.totalorder %s17, 1
      %p188 = por %p186, %p187
      %p189 = scmp.ne.s32.totalorder %s181, %s184
      %p190 = scmp.eq.s32.totalorder %s17, 0
      %p191 = por %p189, %p190
      %p192 = scmp.ne.s32.totalorder %s181, %s184
      %p193 = scmp.eq.s32.totalorder %s22, 1
      %p194 = por %p192, %p193
      %p195 = scmp.ne.s32.totalorder %s184, %s185
      %p196 = scmp.eq.s32.totalorder %s22, 0
      %p197 = por %p195, %p196
      %p198 = scmp.ne.s32.totalorder %s184, %s185
      %p199 = scmp.eq.s32.totalorder %s23, 1
      %p200 = por %p198, %p199
      %p202 = scmp.ne.s32.totalorder %s185, %s201
      %p203 = scmp.eq.s32.totalorder %s23, 0
      %p204 = por %p202, %p203
      %s205 = ssub.s32 %s24, %s36
      %s206 = ssub.s32 %s25, %s32
      %s207 = sor.u32 %s205, %s206
      %p208 = scmp.eq.s32.totalorder %s207, 0
      %s210 = sadd.s32 %s209, 1
      %s211 = scalar_select %p208, %s209, %s210
      %p214 = pneg %p208
      %p215 = scmp.eq.s32.totalorder %s17, 1
      %p216 = por %p214, %p215
      %p217 = scmp.ne.s32.totalorder %s209, %s212
      %p218 = scmp.eq.s32.totalorder %s17, 0
      %p219 = por %p217, %p218
      %p220 = scmp.ne.s32.totalorder %s209, %s212
      %p221 = scmp.eq.s32.totalorder %s22, 1
      %p222 = por %p220, %p221
      %p223 = scmp.ne.s32.totalorder %s212, %s213
      %p224 = scmp.eq.s32.totalorder %s22, 0
      %p225 = por %p223, %p224
      %p226 = scmp.ne.s32.totalorder %s212, %s213
      %p227 = scmp.eq.s32.totalorder %s23, 1
      %p228 = por %p226, %p227
      %p230 = scmp.ne.s32.totalorder %s213, %s229
      %p231 = scmp.eq.s32.totalorder %s23, 0
      %p232 = por %p230, %p231
      %p233 = scmp.le.s32.totalorder 1, %s17
      %p234 = scmp.lt.s32.totalorder %s17, 3
      %p235 = pnand %p233, %p234
      %p236 = pneg %p235
      // Predicated region
      $region9: #{impaug1_forward.1} parent=5 // pred_check
        _
      $region10: #{impaug1_forward.1} parent=5 // pred_check_branch
        %238 = sbr.rel (%p235) target = $region12
      $region11: #{impaug1_forward.1} parent=5 // pred_region
        %s239 = ssub.s32 %s17, 1
        // Predicated region
        $region13: #{impaug1_forward.1} parent=11 // pred_check
          %p240 = pneg %p78
        $region14: #{impaug1_forward.1} parent=11 // pred_check_branch
          %242 = sbr.rel (%p240) target = $region16
        $region15: #{impaug1_forward.1} parent=11 // pred_region
          _
        $region16: #{impaug1_forward.1} parent=11 // pred_fallthru
          _
        // Predicated region
        $region17: #{impaug1_forward.1} parent=11 // pred_check
          %p243 = pneg %p99
        $region18: #{impaug1_forward.1} parent=11 // pred_check_branch
          %245 = sbr.rel (%p243) target = $region20
        $region19: #{impaug1_forward.1} parent=11 // pred_region
          _
        $region20: #{impaug1_forward.1} parent=11 // pred_fallthru
          _
        // Predicated region
        $region21: #{impaug1_forward.1} parent=11 // pred_check
          %p246 = pneg %p120
        $region22: #{impaug1_forward.1} parent=11 // pred_check_branch
          %248 = sbr.rel (%p246) target = $region24
        $region23: #{impaug1_forward.1} parent=11 // pred_region
          _
        $region24: #{impaug1_forward.1} parent=11 // pred_fallthru
          _
        // Predicated region
        $region25: #{impaug1_forward.1} parent=11 // pred_check
          %p249 = pneg %p141
        $region26: #{impaug1_forward.1} parent=11 // pred_check_branch
          %251 = sbr.rel (%p249) target = $region28
        $region27: #{impaug1_forward.1} parent=11 // pred_region
          _
        $region28: #{impaug1_forward.1} parent=11 // pred_fallthru
          _
      $region12: #{impaug1_forward.1} parent=5 // pred_fallthru
        _
      %p252 = scmp.lt.s32.totalorder %s17, 2
      // Predicated region
      $region29: #{impaug1_forward.1} parent=5 // pred_check
        %p253 = pneg %p252
      $region30: #{impaug1_forward.1} parent=5 // pred_check_branch
        %255 = sbr.rel (%p253) target = $region32
      $region31: #{impaug1_forward.1} parent=5 // pred_region
        // Predicated region
        $region33: #{impaug1_forward.1} parent=31 // pred_check
          %p256 = pneg %p51
        $region34: #{impaug1_forward.1} parent=31 // pred_check_branch
          %258 = sbr.rel (%p256) target = $region36
        $region35: #{impaug1_forward.1} parent=31 // pred_region
          %p259 = scmp.lt.s32.totalorder %s24, 1
          %s260 = scalar_select %p259, %s24, 1
          %p261 = scmp.lt.s32.totalorder %s25, 0
          %s262 = scalar_select %p261, %s25, 0
          %s263 = smul.addr %s260, 2
          %s264 = sadd.s32 %s262, %s263
          %s265 = smul.addr %s264, 8
          %s266 = scalar_lea.vmem %s0, %s265
        $region36: #{impaug1_forward.1} parent=31 // pred_fallthru
          _
      $region32: #{impaug1_forward.1} parent=5 // pred_fallthru
        _
      %p267 = scmp.le.s32.totalorder 1, %s17
      %p268 = scmp.lt.s32.totalorder %s17, 3
      %p269 = pnand %p267, %p268
      %p270 = pneg %p269
      // Predicated region
      $region37: #{impaug1_forward.1} parent=5 // pred_check
        _
      $region38: #{impaug1_forward.1} parent=5 // pred_check_branch
        %272 = sbr.rel (%p269) target = $region40
      $region39: #{impaug1_forward.1} parent=5 // pred_region
        %s273 = ssub.s32 %s17, 1
        %p274 = scmp.lt.s32.totalorder %s26, 1
        %s275 = scalar_select %p274, %s26, 1
        %p276 = scmp.lt.s32.totalorder %s27, 0
        %s277 = scalar_select %p276, %s27, 0
        %s278 = smul.addr %s275, 2
        %s279 = sadd.s32 %s277, %s278
        %s280 = smul.addr %s279, 8
        %s281 = scalar_lea.vmem %s0, %s280
        %p282 = pneg %p57
        %p283 = pneg %p54
        %p284 = pneg %p78
        %p285 = pneg %p75
        %p286 = pneg %p99
        %p287 = pneg %p96
        %p288 = pneg %p120
        %p289 = pneg %p117
        %p290 = pneg %p141
        %p291 = pneg %p138
        %p292 = pneg %p169
        %p293 = pneg %p166
        %s294 = sand.u32 %s156, 1
        %s295 = scalar_lea.sflag [#allocation3], %s294
        %s296 = sand.u32 %s156, 1
        %s297 = smul.addr %s296, 16
        %s298 = scalar_lea.vmem [#allocation2], %s297
        %p299 = pneg %p197
        %p300 = pneg %p194
        %p301 = scmp.lt.s32.totalorder %s26, 1
        %s302 = scalar_select %p301, %s26, 1
        %p303 = scmp.lt.s32.totalorder %s27, 0
        %s304 = scalar_select %p303, %s27, 0
        %s305 = smul.addr %s302, 2
        %s306 = sadd.s32 %s304, %s305
        %s307 = smul.addr %s306, 8
        %s308 = scalar_lea.vmem %s6, %s307
        %p309 = pneg %p225
        %p310 = pneg %p222
        %p311 = scmp.lt.s32.totalorder %s26, 1
        %s312 = scalar_select %p311, %s26, 1
        %p313 = scmp.lt.s32.totalorder %s27, 0
        %s314 = scalar_select %p313, %s27, 0
        %s315 = smul.addr %s314, 2
        %s316 = smul.addr %s312, 2
        %s317 = sadd.s32 %s315, %s316
        %s318 = smul.addr %s317, 8
        %s319 = scalar_lea.vmem %s7, %s318
        %p320 = scmp.lt.s32.totalorder %s26, 1
        %s321 = scalar_select %p320, %s26, 1
        %p322 = scmp.lt.s32.totalorder %s27, 0
        %s323 = scalar_select %p322, %s27, 0
        %s324 = smul.addr %s321, 2
        %s325 = sadd.s32 %s323, %s324
        %s326 = smul.addr %s325, 8
        %s327 = scalar_lea.vmem %s0, %s326
        %p328 = scmp.lt.s32.totalorder %s26, 1
        %s329 = scalar_select %p328, %s26, 1
        %p330 = scmp.lt.s32.totalorder %s27, 0
        %s331 = scalar_select %p330, %s27, 0
        %s332 = smul.addr %s329, 2
        %s333 = sadd.s32 %s331, %s332
        %s334 = smul.addr %s333, 8
        %s335 = scalar_lea.vmem %s6, %s334
        %p336 = scmp.lt.s32.totalorder %s26, 1
        %s337 = scalar_select %p336, %s26, 1
        %p338 = scmp.lt.s32.totalorder %s27, 0
        %s339 = scalar_select %p338, %s27, 0
        %s340 = smul.addr %s339, 2
        %s341 = smul.addr %s337, 2
        %s342 = sadd.s32 %s340, %s341
        %s343 = smul.addr %s342, 8
        %s344 = scalar_lea.vmem %s7, %s343
        %v345 = vld [vmem:[%s327] sm:$0xff]
        %v346 = vld [vmem:[%s327 + $0x8] sm:$0xff]
        %v347 = vmul.f32 %v345, %v345
        %v348 = vmul.f32 %v346, %v346
        %v349 = vld [vmem:[%s3] sm:$0xff]
        %v350 = vld [vmem:[%s3 + $0x8] sm:$0xff]
        %v351 = vld [vmem:[%s3 + $0x10] sm:$0xff]
        %v352 = vld [vmem:[%s3 + $0x18] sm:$0xff]
        %v353 = vld [vmem:[%s3 + $0x20] sm:$0xff]
        %v354 = vld [vmem:[%s3 + $0x28] sm:$0xff]
        %v355 = vld [vmem:[%s3 + $0x30] sm:$0xff]
        %v356 = vld [vmem:[%s3 + $0x38] sm:$0xff]
        %v357 = vld [vmem:[%s3 + $0x40] sm:$0xff]
        %v358 = vld [vmem:[%s3 + $0x48] sm:$0xff]
        %v359 = vld [vmem:[%s3 + $0x50] sm:$0xff]
        %v360 = vld [vmem:[%s3 + $0x58] sm:$0xff]
        %v361 = vld [vmem:[%s3 + $0x60] sm:$0xff]
        %v362 = vld [vmem:[%s3 + $0x68] sm:$0xff]
        %v363 = vld [vmem:[%s3 + $0x70] sm:$0xff]
        %v364 = vld [vmem:[%s3 + $0x78] sm:$0xff]
        %365 = vmatprep.subr.mxu0 0.0
        %366 = vmatpush1.msra.mxu0 %v349
        %367 = vmatprep.subr.mxu0 0.0
        %368 = vmatpush1.msra.mxu0 %v350
        %369 = vmatprep.subr.mxu0 0.0
        %370 = vmatpush1.msra.mxu0 %v351
        %371 = vmatprep.subr.mxu0 0.0
        %372 = vmatpush1.msra.mxu0 %v352
        %373 = vmatprep.subr.mxu0 0.0
        %374 = vmatpush1.msra.mxu0 %v353
        %375 = vmatprep.subr.mxu0 0.0
        %376 = vmatpush1.msra.mxu0 %v354
        %377 = vmatprep.subr.mxu0 0.0
        %378 = vmatpush1.msra.mxu0 %v355
        %379 = vmatprep.subr.mxu0 0.0
        %380 = vmatpush1.msra.mxu0 %v356
        %381 = vmatprep.subr.mxu0 0.0
        %382 = vmatpush1.msra.mxu0 %v357
        %383 = vmatprep.subr.mxu0 0.0
        %384 = vmatpush1.msra.mxu0 %v358
        %385 = vmatprep.subr.mxu0 0.0
        %386 = vmatpush1.msra.mxu0 %v359
        %387 = vmatprep.subr.mxu0 0.0
        %388 = vmatpush1.msra.mxu0 %v360
        %389 = vmatprep.subr.mxu0 0.0
        %390 = vmatpush1.msra.mxu0 %v361
        %391 = vmatprep.subr.mxu0 0.0
        %392 = vmatpush1.msra.mxu0 %v362
        %393 = vmatprep.subr.mxu0 0.0
        %394 = vmatpush1.msra.mxu0 %v363
        %395 = vmatprep.subr.mxu0 0.0
        %396 = vmatpush1.msra.mxu0 %v364
        %397 = vmatprep.subr.mxu0 0.0
        %398 = vmatpush1.msra.mxu0 0.0
        %399 = vmatprep.subr.mxu0 0.0
        %400 = vmatpush1.msra.mxu0 0.0
        %401 = vmatprep.subr.mxu0 0.0
        %402 = vmatpush1.msra.mxu0 0.0
        %403 = vmatprep.subr.mxu0 0.0
        %404 = vmatpush1.msra.mxu0 0.0
        %405 = vmatprep.subr.mxu0 0.0
        %406 = vmatpush1.msra.mxu0 0.0
        %407 = vmatprep.subr.mxu0 0.0
        %408 = vmatpush1.msra.mxu0 0.0
        %409 = vmatprep.subr.mxu0 0.0
        %410 = vmatpush1.msra.mxu0 0.0
        %411 = vmatprep.subr.mxu0 0.0
        %412 = vmatpush1.msra.mxu0 0.0
        %413 = vmatprep.subr.mxu0 0.0
        %414 = vmatpush1.msra.mxu0 0.0
        %415 = vmatprep.subr.mxu0 0.0
        %416 = vmatpush1.msra.mxu0 0.0
        %417 = vmatprep.subr.mxu0 0.0
        %418 = vmatpush1.msra.mxu0 0.0
        %419 = vmatprep.subr.mxu0 0.0
        %420 = vmatpush1.msra.mxu0 0.0
        %421 = vmatprep.subr.mxu0 0.0
        %422 = vmatpush1.msra.mxu0 0.0
        %423 = vmatprep.subr.mxu0 0.0
        %424 = vmatpush1.msra.mxu0 0.0
        %425 = vmatprep.subr.mxu0 0.0
        %426 = vmatpush1.msra.mxu0 0.0
        %427 = vmatprep.subr.mxu0 0.0
        %428 = vmatpush1.msra.mxu0 0.0
        %429 = vmatprep.mubr.f32.mxu0 0.0
        %430 = vmatmul.mubr.f32.gmra.mrb[0].mxu0 %v347
        %v431 = vpop.f32.mrb[0].mxu0
        %v432 = vadd.f32 0.0, %v431
        %v433 = vpop.f32.mrb[0].mxu0
        %434 = vmatprep.mubr.f32.mxu0 0.0
        %435 = vmatmul.mubr.f32.gmra.mrb[0].mxu0 %v348
        %v436 = vpop.f32.mrb[0].mxu0
        %v437 = vadd.f32 0.0, %v436
        %v438 = vpop.f32.mrb[0].mxu0
        %439 = vdwg.mxu0
        %v440 = vmax.f32 %v432, 1e-20
        %v441 = vmax.f32 %v437, 1e-20
        %v442 = vlog2.pop %v440
        %v443 = vmul.f32 %v442, 0.6931472
        %v444 = vlog2.pop %v441
        %v445 = vmul.f32 %v444, 0.6931472
        %v446 = vmul.f32 %v443, 4.3429446
        %v447 = vmul.f32 %v445, 4.3429446
        %v448 = vld [vmem:[%s1] sm:$0xff]
        %v449 = vld [vmem:[%s1 + $0x8] sm:$0xff]
        %v450 = vld [vmem:[%s2] sm:$0xff]
        %v451 = vld [vmem:[%s2 + $0x8] sm:$0xff]
        %453 = vset.pattern.permute.xlu0 0
        %454 = vperm.xlu0 %453, %v450
        %v455 = vpop.permute.xlu0 %454
        %458 = vset.pattern.permute.xlu0 0
        %459 = vperm.xlu0 %458, %v451
        %v460 = vpop.permute.xlu0 %459
        %vm462 = vcmask 130048
        %v464 = vsel %vm462, %v448, 0
        %v467 = vsel %vm462, %v449, 0
        %469 = vmatprep.subr.mxu0 0.0
        %470 = vmatpush1.msra.mxu0 %v446
        %471 = vmatprep.subr.mxu0 0.0
        %472 = vmatpush1.msra.mxu0 %v447
        %473 = vmatprep.subr.mxu0 0.0
        %474 = vmatpush1.msra.mxu0 0.0
        %475 = vmatprep.subr.mxu0 0.0
        %476 = vmatpush1.msra.mxu0 0.0
        %477 = vmatprep.subr.mxu0 0.0
        %478 = vmatpush1.msra.mxu0 0.0
        %479 = vmatprep.subr.mxu0 0.0
        %480 = vmatpush1.msra.mxu0 0.0
        %481 = vmatprep.subr.mxu0 0.0
        %482 = vmatpush1.msra.mxu0 0.0
        %483 = vmatprep.subr.mxu0 0.0
        %484 = vmatpush1.msra.mxu0 0.0
        %485 = vmatprep.subr.mxu0 0.0
        %486 = vmatpush1.msra.mxu0 0.0
        %487 = vmatprep.subr.mxu0 0.0
        %488 = vmatpush1.msra.mxu0 0.0
        %489 = vmatprep.subr.mxu0 0.0
        %490 = vmatpush1.msra.mxu0 0.0
        %491 = vmatprep.subr.mxu0 0.0
        %492 = vmatpush1.msra.mxu0 0.0
        %493 = vmatprep.subr.mxu0 0.0
        %494 = vmatpush1.msra.mxu0 0.0
        %495 = vmatprep.subr.mxu0 0.0
        %496 = vmatpush1.msra.mxu0 0.0
        %497 = vmatprep.subr.mxu0 0.0
        %498 = vmatpush1.msra.mxu0 0.0
        %499 = vmatprep.subr.mxu0 0.0
        %500 = vmatpush1.msra.mxu0 0.0
        %501 = vmatprep.subr.mxu0 0.0
        %502 = vmatpush1.msra.mxu0 0.0
        %503 = vmatprep.subr.mxu0 0.0
        %504 = vmatpush1.msra.mxu0 0.0
        %505 = vmatprep.subr.mxu0 0.0
        %506 = vmatpush1.msra.mxu0 0.0
        %507 = vmatprep.subr.mxu0 0.0
        %508 = vmatpush1.msra.mxu0 0.0
        %509 = vmatprep.subr.mxu0 0.0
        %510 = vmatpush1.msra.mxu0 0.0
        %511 = vmatprep.subr.mxu0 0.0
        %512 = vmatpush1.msra.mxu0 0.0
        %513 = vmatprep.subr.mxu0 0.0
        %514 = vmatpush1.msra.mxu0 0.0
        %515 = vmatprep.subr.mxu0 0.0
        %516 = vmatpush1.msra.mxu0 0.0
        %517 = vmatprep.subr.mxu0 0.0
        %518 = vmatpush1.msra.mxu0 0.0
        %519 = vmatprep.subr.mxu0 0.0
        %520 = vmatpush1.msra.mxu0 0.0
        %521 = vmatprep.subr.mxu0 0.0
        %522 = vmatpush1.msra.mxu0 0.0
        %523 = vmatprep.subr.mxu0 0.0
        %524 = vmatpush1.msra.mxu0 0.0
        %525 = vmatprep.subr.mxu0 0.0
        %526 = vmatpush1.msra.mxu0 0.0
        %527 = vmatprep.subr.mxu0 0.0
        %528 = vmatpush1.msra.mxu0 0.0
        %529 = vmatprep.subr.mxu0 0.0
        %530 = vmatpush1.msra.mxu0 0.0
        %531 = vmatprep.subr.mxu0 0.0
        %532 = vmatpush1.msra.mxu0 0.0
        %533 = vmatprep.mubr.f32.mxu0 0.0
        %534 = vmatmul.mubr.f32.gmra.mrb[0].mxu0 %v464
        %v535 = vpop.f32.mrb[0].mxu0
        %v536 = vadd.f32 %v455, %v535
        %v537 = vpop.f32.mrb[0].mxu0
        %538 = vmatprep.mubr.f32.mxu0 0.0
        %539 = vmatmul.mubr.f32.gmra.mrb[0].mxu0 %v467
        %v540 = vpop.f32.mrb[0].mxu0
        %v541 = vadd.f32 %v460, %v540
        %v542 = vpop.f32.mrb[0].mxu0
        %543 = vdwg.mxu0
        %v544 = vxor.u32 %v536, 2147483648
        %v545 = vxor.u32 %v541, 2147483648
        %v546 = vmul.f32 %v544, 1.442695
        %v547 = vpow.pop %v546
        %v548 = vmul.f32 %v545, 1.442695
        %v549 = vpow.pop %v548
        %v550 = vadd.f32 %v547, 1.0
        %v551 = vadd.f32 %v549, 1.0
        %v552 = vrcp.pop %v550
        %v553 = vmul.f32 1.0, %v552
        %v554 = vrcp.pop %v551
        %v555 = vmul.f32 1.0, %v554
        %vm556 = vcmask 523264
        %557 = vst.msk [vmem:[%s298] sm:$0xff] %vm556, %v553
        %558 = vst.msk [vmem:[%s298 + $0x8] sm:$0xff] %vm556, %v555
        %v559 = vld [vmem:[%s4] sm:$0xff]
        %v560 = vld [vmem:[%s4 + $0x8] sm:$0xff]
        %v561 = vld [vmem:[%s4 + $0x10] sm:$0xff]
        %v562 = vld [vmem:[%s4 + $0x18] sm:$0xff]
        %v563 = vld [vmem:[%s4 + $0x20] sm:$0xff]
        %v564 = vld [vmem:[%s4 + $0x28] sm:$0xff]
        %v565 = vld [vmem:[%s4 + $0x30] sm:$0xff]
        %v566 = vld [vmem:[%s4 + $0x38] sm:$0xff]
        %v568 = vsel %vm556, %v553, 0
        %v571 = vsel %vm556, %v555, 0
        %573 = vmatprep.subr.mxu0 0.0
        %574 = vmatpush1.msra.mxu0 %v559
        %575 = vmatprep.subr.mxu0 0.0
        %576 = vmatpush1.msra.mxu0 %v560
        %577 = vmatprep.subr.mxu0 0.0
        %578 = vmatpush1.msra.mxu0 %v561
        %579 = vmatprep.subr.mxu0 0.0
        %580 = vmatpush1.msra.mxu0 %v562
        %581 = vmatprep.subr.mxu0 0.0
        %582 = vmatpush1.msra.mxu0 %v563
        %583 = vmatprep.subr.mxu0 0.0
        %584 = vmatpush1.msra.mxu0 %v564
        %585 = vmatprep.subr.mxu0 0.0
        %586 = vmatpush1.msra.mxu0 %v565
        %587 = vmatprep.subr.mxu0 0.0
        %588 = vmatpush1.msra.mxu0 %v566
        %589 = vmatprep.subr.mxu0 0.0
        %590 = vmatpush1.msra.mxu0 0.0
        %591 = vmatprep.subr.mxu0 0.0
        %592 = vmatpush1.msra.mxu0 0.0
        %593 = vmatprep.subr.mxu0 0.0
        %594 = vmatpush1.msra.mxu0 0.0
        %595 = vmatprep.subr.mxu0 0.0
        %596 = vmatpush1.msra.mxu0 0.0
        %597 = vmatprep.subr.mxu0 0.0
        %598 = vmatpush1.msra.mxu0 0.0
        %599 = vmatprep.subr.mxu0 0.0
        %600 = vmatpush1.msra.mxu0 0.0
        %601 = vmatprep.subr.mxu0 0.0
        %602 = vmatpush1.msra.mxu0 0.0
        %603 = vmatprep.subr.mxu0 0.0
        %604 = vmatpush1.msra.mxu0 0.0
        %605 = vmatprep.subr.mxu0 0.0
        %606 = vmatpush1.msra.mxu0 0.0
        %607 = vmatprep.subr.mxu0 0.0
        %608 = vmatpush1.msra.mxu0 0.0
        %609 = vmatprep.subr.mxu0 0.0
        %610 = vmatpush1.msra.mxu0 0.0
        %611 = vmatprep.subr.mxu0 0.0
        %612 = vmatpush1.msra.mxu0 0.0
        %613 = vmatprep.subr.mxu0 0.0
        %614 = vmatpush1.msra.mxu0 0.0
        %615 = vmatprep.subr.mxu0 0.0
        %616 = vmatpush1.msra.mxu0 0.0
        %617 = vmatprep.subr.mxu0 0.0
        %618 = vmatpush1.msra.mxu0 0.0
        %619 = vmatprep.subr.mxu0 0.0
        %620 = vmatpush1.msra.mxu0 0.0
        %621 = vmatprep.subr.mxu0 0.0
        %622 = vmatpush1.msra.mxu0 0.0
        %623 = vmatprep.subr.mxu0 0.0
        %624 = vmatpush1.msra.mxu0 0.0
        %625 = vmatprep.subr.mxu0 0.0
        %626 = vmatpush1.msra.mxu0 0.0
        %627 = vmatprep.subr.mxu0 0.0
        %628 = vmatpush1.msra.mxu0 0.0
        %629 = vmatprep.subr.mxu0 0.0
        %630 = vmatpush1.msra.mxu0 0.0
        %631 = vmatprep.subr.mxu0 0.0
        %632 = vmatpush1.msra.mxu0 0.0
        %633 = vmatprep.subr.mxu0 0.0
        %634 = vmatpush1.msra.mxu0 0.0
        %635 = vmatprep.subr.mxu0 0.0
        %636 = vmatpush1.msra.mxu0 0.0
        %637 = vmatprep.mubr.f32.mxu0 0.0
        %638 = vmatmul.mubr.f32.gmra.mrb[0].mxu0 %v568
        %v639 = vpop.f32.mrb[0].mxu0
        %v640 = vadd.f32 1.0, %v639
        %v641 = vpop.f32.mrb[0].mxu0
        %642 = vmatprep.mubr.f32.mxu0 0.0
        %643 = vmatmul.mubr.f32.gmra.mrb[0].mxu0 %v571
        %v644 = vpop.f32.mrb[0].mxu0
        %v645 = vadd.f32 1.0, %v644
        %v646 = vpop.f32.mrb[0].mxu0
        %647 = vdwg.mxu0
        %v648 = vmul.f32 %v345, %v640
        %v649 = vmul.f32 %v346, %v645
        %650 = vst [vmem:[%s335] sm:$0xff] %v648
        %651 = vst [vmem:[%s335 + $0x8] sm:$0xff] %v649
        %v652 = vadd.f32 %v553, 1.0
        %v653 = vadd.f32 %v555, 1.0
        %v654 = vlog2.pop %v652
        %v655 = vmul.f32 %v654, 0.6931472
        %v656 = vlog2.pop %v653
        %v657 = vmul.f32 %v656, 0.6931472
        %v658 = vmul.f32 %v655, 8.685889
        %v659 = vmul.f32 %v657, 8.685889
        %v660 = vadd.f32 %v446, %v658
        %v661 = vadd.f32 %v447, %v659
        %v662 = vsel %vm556, %v660, 0.0
        %663 = vadd.xlane.f32.xlu0 %v662
        %v664 = vpop.xlane.xlu0 %663
        %v665 = vsel %vm556, %v661, 0.0
        %666 = vadd.xlane.f32.xlu0 %v665
        %v667 = vpop.xlane.xlu0 %666
        %vm668 = vcmask 7168
        %669 = vst.msk [vmem:[%s344] sm:$0xff] %vm668, %v664
        %670 = vst.msk [vmem:[%s344 + $0x8] sm:$0xff] %vm668, %v667
        %s671 = sand.u32 %s156, 1
        %s672 = scalar_lea.sflag [#allocation3], %s671
        %s673 = sand.u32 %s156, 1
        %s674 = smul.addr %s673, 16
        %s675 = scalar_lea.vmem [#allocation2], %s674
        %p676 = scmp.lt.s32.totalorder %s26, 1
        %s677 = scalar_select %p676, %s26, 1
        %p678 = scmp.lt.s32.totalorder %s27, 0
        %s679 = scalar_select %p678, %s27, 0
        %s680 = smul.addr %s677, 2
        %s681 = sadd.s32 %s679, %s680
        %s682 = smul.addr %s681, 8
        %s683 = scalar_lea.vmem %s6, %s682
        %p684 = scmp.lt.s32.totalorder %s26, 1
        %s685 = scalar_select %p684, %s26, 1
        %p686 = scmp.lt.s32.totalorder %s27, 0
        %s687 = scalar_select %p686, %s27, 0
        %s688 = smul.addr %s687, 2
        %s689 = smul.addr %s685, 2
        %s690 = sadd.s32 %s688, %s689
        %s691 = smul.addr %s690, 8
        %s692 = scalar_lea.vmem %s7, %s691
        // Predicated region
        $region41: #{impaug1_forward.1} parent=39 // pred_check
          %p693 = pneg %p166
        $region42: #{impaug1_forward.1} parent=39 // pred_check_branch
          %695 = sbr.rel (%p693) target = $region44
        $region43: #{impaug1_forward.1} parent=39 // pred_region
          %s697 = ssub.s32 256, 256
          %698 = vsyncadd %s672, %s697
          %s699 = smul.addr %s26, 2
          %s700 = sadd.s32 %s27, %s699
          %s701 = smul.addr %s700, 128
          %s702 = scalar_lea.hbm %s5, %s701
          %s703 = sshll.u32 %s675, 4
          %s704 = int_to_ptr.vmem [resolvable:$true] %s703
          %709 = dma.vmem_to_hbm [thread:$0]  %s704, 256, %s702, %s672, 128, 128, 8
        $region44: #{impaug1_forward.1} parent=39 // pred_fallthru
          _
        // Predicated region
        $region45: #{impaug1_forward.1} parent=39 // pred_check
          %p710 = pneg %p194
        $region46: #{impaug1_forward.1} parent=39 // pred_check_branch
          %712 = sbr.rel (%p710) target = $region48
        $region47: #{impaug1_forward.1} parent=39 // pred_region
          _
        $region48: #{impaug1_forward.1} parent=39 // pred_fallthru
          _
        // Predicated region
        $region49: #{impaug1_forward.1} parent=39 // pred_check
          %p713 = pneg %p222
        $region50: #{impaug1_forward.1} parent=39 // pred_check_branch
          %715 = sbr.rel (%p713) target = $region52
        $region51: #{impaug1_forward.1} parent=39 // pred_region
          _
        $region52: #{impaug1_forward.1} parent=39 // pred_fallthru
          _
      $region40: #{impaug1_forward.1} parent=5 // pred_fallthru
        _
      %p716 = scmp.le.s32.totalorder 2, %s17
      // Predicated region
      $region53: #{impaug1_forward.1} parent=5 // pred_check
        %p717 = pneg %p716
      $region54: #{impaug1_forward.1} parent=5 // pred_check_branch
        %719 = sbr.rel (%p717) target = $region56
      $region55: #{impaug1_forward.1} parent=5 // pred_region
        %s720 = ssub.s32 %s17, 2
        // Predicated region
        $region57: #{impaug1_forward.1} parent=55 // pred_check
          %p721 = pneg %p172
        $region58: #{impaug1_forward.1} parent=55 // pred_check_branch
          %723 = sbr.rel (%p721) target = $region60
        $region59: #{impaug1_forward.1} parent=55 // pred_region
          %s724 = sand.u32 %s157, 1
          %s725 = scalar_lea.sflag [#allocation3], %s724
          %s726 = sand.u32 %s157, 1
          %s727 = smul.addr %s726, 16
          %s728 = scalar_lea.vmem [#allocation2], %s727
          %729 = dma.done %s725, 256
        $region60: #{impaug1_forward.1} parent=55 // pred_fallthru
          _
        // Predicated region
        $region61: #{impaug1_forward.1} parent=55 // pred_check
          %p730 = pneg %p200
        $region62: #{impaug1_forward.1} parent=55 // pred_check_branch
          %732 = sbr.rel (%p730) target = $region64
        $region63: #{impaug1_forward.1} parent=55 // pred_region
          %p733 = scmp.lt.s32.totalorder %s28, 1
          %s734 = scalar_select %p733, %s28, 1
          %p735 = scmp.lt.s32.totalorder %s29, 0
          %s736 = scalar_select %p735, %s29, 0
          %s737 = smul.addr %s734, 2
          %s738 = sadd.s32 %s736, %s737
          %s739 = smul.addr %s738, 8
          %s740 = scalar_lea.vmem %s6, %s739
        $region64: #{impaug1_forward.1} parent=55 // pred_fallthru
          _
        // Predicated region
        $region65: #{impaug1_forward.1} parent=55 // pred_check
          %p741 = pneg %p228
        $region66: #{impaug1_forward.1} parent=55 // pred_check_branch
          %743 = sbr.rel (%p741) target = $region68
        $region67: #{impaug1_forward.1} parent=55 // pred_region
          %p744 = scmp.lt.s32.totalorder %s28, 1
          %s745 = scalar_select %p744, %s28, 1
          %p746 = scmp.lt.s32.totalorder %s29, 0
          %s747 = scalar_select %p746, %s29, 0
          %s748 = smul.addr %s747, 2
          %s749 = smul.addr %s745, 2
          %s750 = sadd.s32 %s748, %s749
          %s751 = smul.addr %s750, 8
          %s752 = scalar_lea.vmem %s7, %s751
        $region68: #{impaug1_forward.1} parent=55 // pred_fallthru
          _
      $region56: #{impaug1_forward.1} parent=5 // pred_fallthru
        _
    $region6: #{impaug1_forward.1} parent=1 // loop_footer
      %s21 = sadd.s32 1, %s17
    $region7: #{impaug1_forward.1} parent=1 // loop_footer_branch
      %16 = sbr.rel target = $region3
    $region8: #{impaug1_forward.1} parent=1 // loop_exit
      _
    %753 = vsyncpa [#allocation3], 1
    %s754 = scalar_lea.sflag [#allocation3], 1
    %755 = vsyncpa %s754, 1

</llo_original>
